<compile_context>
chip_gen: v5e
topology: v5e:2x2
jax: 0.10.0
libtpu: 0.0.40
codegen_flags: <defaults>
</compile_context>

<pallas_src>
import functools

import numpy as np

import jax
import jax.numpy as jnp
from jax.experimental import pallas as pl
from jax.experimental.pallas import tpu as pltpu


# ----------------------------------------------------------------------------
# Fused kernel body (built from a static spec: layer configs + blob offsets)
# ----------------------------------------------------------------------------
def _make_kernel(spec):
    eps = float(spec["eps"])
    n_batch = spec["N"]
    c0, h0 = spec["C0"], spec["H0"]
    layers = spec["layers"]
    n_dense = spec["n_dense"]
    off = spec["offsets"]

    def kernel(x_ref, p_ref, o_ref):
        def param(name):
            r0, nr, nc = off[name]
            return p_ref[r0:r0 + nr, 0:nc]

        # ---- relayout NCHW rows -> lane-dense [N*H0, C0*W0] (col = c*W0 + w) --
        # x_ref is the free NCHW bitcast-reshape [N*C0*H0, W0]; slices below are
        # sublane-tile aligned (H0 % 8 == 0).
        chans = []
        for c in range(c0):
            rows = [x_ref[(n * c0 + c) * h0:(n * c0 + c + 1) * h0, :]
                    for n in range(n_batch)]
            chans.append(rows[0] if n_batch == 1 else
                         jnp.concatenate(rows, axis=0))
        act = chans[0] if c0 == 1 else jnp.concatenate(chans, axis=1)
        act = act.astype(jnp.float32)

        # ---- conv -> BatchNorm(train) -> ReLU stack (all MXU matmuls) --------
        for li, cfg in enumerate(layers):
            k, oh, ow, cout = cfg["k"], cfg["oh"], cfg["ow"], cfg["cout"]
            # Horizontal taps + channel contraction: one matmul per layer.
            ag = jnp.dot(act, param(f"G{li}"),
                         preferred_element_type=jnp.float32)
            blk = ow * cout
            y = None
            for di in range(k):                      # vertical taps / stride
                part = jnp.dot(param(f"L{li}_{di}"),
                               ag[:, di * blk:(di + 1) * blk],
                               preferred_element_type=jnp.float32)
                y = part if y is None else y + part
            # y: [N*oh, ow*cout]; conv bias omitted (cancelled by BN mean sub).

            # BatchNorm2d, training mode: per-channel stats over (N, OH, OW),
            # biased variance.  Channel reductions / broadcasts via tiny 0/1
            # matmuls (MXU side) instead of lane shuffles.
            cnt = float(n_batch * oh * ow)
            msum, msum_t = param(f"Msum{li}"), param(f"MsumT{li}")
            mean_c = jnp.dot(jnp.sum(y, axis=0, keepdims=True), msum,
                             preferred_element_type=jnp.float32) / cnt
            d = y - jnp.dot(mean_c, msum_t, preferred_element_type=jnp.float32)
            var_c = jnp.dot(jnp.sum(d * d, axis=0, keepdims=True), msum,
                            preferred_element_type=jnp.float32) / cnt
            scale_c = param(f"gamma{li}") * jax.lax.rsqrt(var_c + eps)
            scale_b = jnp.dot(scale_c, msum_t,
                              preferred_element_type=jnp.float32)
            shift_b = jnp.dot(param(f"beta{li}"), msum_t,
                              preferred_element_type=jnp.float32)
            act = jnp.maximum(d * scale_b + shift_b, 0.0)  # [N*oh, ow*cout]

        # ---- flatten: pack spatial row-slabs lane-contiguously -> [N, feat] --
        oh_l = layers[-1]["oh"]
        pieces = []
        for i in range(oh_l):
            rows = [act[n * oh_l + i:n * oh_l + i + 1, :]
                    for n in range(n_batch)]
            pieces.append(rows[0] if n_batch == 1 else
                          jnp.concatenate(rows, axis=0))
        h = pieces[0] if oh_l == 1 else jnp.concatenate(pieces, axis=1)
        # dense1's weight rows were permuted at pack time to match this order.

        # ---- dense -> ReLU stack (single matmul per layer) -------------------
        for dl in range(n_dense):
            h = jnp.maximum(
                jnp.dot(h, param(f"W{dl}"), preferred_element_type=jnp.float32)
                + param(f"b{dl}"), 0.0)

        o_ref[...] = h.astype(o_ref.dtype)

    return kernel


# ----------------------------------------------------------------------------
# Eager (outside-jit) parameter / constant packing -> one f32 blob + spec
# ----------------------------------------------------------------------------
def pack_cnn_encoder_params(params, kernel_sizes, strides, input_chw, batch,
                            eps=1e-5):
    c_in, h_in, w_in = input_chw
    n = batch
    blocks = []

    def add(name, arr):
        arr = np.asarray(arr, np.float32)
        assert arr.ndim == 2
        blocks.append((name, arr))

    layers = []
    row_order = "cw"   # layer-1 input columns are (c, w); later layers (w, c)
    for li, ((wc, _bc, gamma, beta), k, s) in enumerate(
            zip(params["conv"], kernel_sizes, strides)):
        wc = np.asarray(wc, np.float32)          # [k, k, cin, cout]
        cout = wc.shape[-1]
        oh = (h_in - k) // s + 1
        ow = (w_in - k) // s + 1
        # Toeplitz-expanded conv weight: rows = input columns, cols = (di,j,co).
        g = np.zeros((w_in * c_in, k * ow * cout), np.float32)
        for di in range(k):
            for dj in range(k):
                for j in range(ow):
                    wpos = s * j + dj
                    if wpos >= w_in:
                        continue
                    for c in range(c_in):
                        row = c * w_in + wpos if row_order == "cw" \
                            else wpos * c_in + c
                        g[row, (di * ow + j) * cout:(di * ow + j + 1) * cout] \
                            = wc[di, dj, c]
        add(f"G{li}", g)
        for di in range(k):                      # 0/1 row-selection matrices
            sel = np.zeros((n * oh, n * h_in), np.float32)
            for nn in range(n):
                for i in range(oh):
                    sel[nn * oh + i, nn * h_in + s * i + di] = 1.0
            add(f"L{li}_{di}", sel)
        msum = np.zeros((ow * cout, cout), np.float32)
        for j in range(ow):
            msum[j * cout:(j + 1) * cout, :] = np.eye(cout, dtype=np.float32)
        add(f"Msum{li}", msum)
        add(f"MsumT{li}", msum.T)
        add(f"gamma{li}", np.asarray(gamma, np.float32).reshape(1, cout))
        add(f"beta{li}", np.asarray(beta, np.float32).reshape(1, cout))
        # conv bias _bc dropped: exactly cancelled by training-mode BN.
        layers.append(dict(k=k, s=s, oh=oh, ow=ow, cout=cout))
        c_in, h_in, w_in = cout, oh, ow
        row_order = "wc"

    dense = [(np.asarray(w, np.float32), np.asarray(b, np.float32))
             for (w, b) in params["dense"]]
    w0, b0 = dense[0]
    d0 = w0.shape[-1]
    flat_dim = c_in * h_in * w_in
    assert w0.shape[0] == flat_dim, (w0.shape, flat_dim)
    # Permute rows once from PyTorch (C, OH, OW) flatten order to (OH, OW, C).
    w0 = (w0.reshape(c_in, h_in, w_in, d0).transpose(1, 2, 0, 3)
          .reshape(flat_dim, d0))
    dense[0] = (w0, b0)
    for dl, (wd, bd) in enumerate(dense):
        add(f"W{dl}", wd)
        add(f"b{dl}", bd.reshape(1, -1))

    # One coalesced blob; each block starts on a sublane-tile (8-row) boundary.
    maxc = max(a.shape[1] for _, a in blocks)
    offsets, r = {}, 0
    for name, a in blocks:
        offsets[name] = (r, a.shape[0], a.shape[1])
        r += -(-a.shape[0] // 8) * 8
    blob = np.zeros((r, maxc), np.float32)
    for name, a in blocks:
        r0, nr, nc = offsets[name]
        blob[r0:r0 + nr, :nc] = a

    spec = dict(eps=eps, N=n, C0=input_chw[0], H0=input_chw[1],
                W0=input_chw[2], layers=layers, n_dense=len(dense),
                out_dim=dense[-1][0].shape[-1], offsets=offsets)
    return jnp.asarray(blob), spec


# ----------------------------------------------------------------------------
# Forward wrapper: one gridless pallas_call for the whole network
# ----------------------------------------------------------------------------
def cnn_encoder_apply(x_nchw, blob, *, spec):
    n, c0, h0, w0 = x_nchw.shape
    assert (n, c0, h0, w0) == (spec["N"], spec["C0"], spec["H0"], spec["W0"])
    # Free (bitcast) reshape only -- no host-side transpose kernel.
    x2d = x_nchw.reshape(n * c0 * h0, w0).astype(jnp.float32)
    vmem = pl.BlockSpec(memory_space=pltpu.MemorySpace.VMEM)
    return pl.pallas_call(
        _make_kernel(spec),
        out_shape=jax.ShapeDtypeStruct((n, spec["out_dim"]), jnp.float32),
        in_specs=[vmem, vmem],
        out_specs=vmem,
    )(x2d, blob)


# ----------------------------------------------------------------------------
# Parameters and a plain-JAX reference (for correctness check only)
# ----------------------------------------------------------------------------
def init_params(key, channels, kernel_sizes, hidden_dims):
    """Deterministic synthetic parameters (not a checkpoint load)."""
    channel_chain = [3] + list(channels)
    params = {"conv": [], "dense": []}
    for i in range(len(channel_chain) - 1):
        c_in, c_out, k = channel_chain[i], channel_chain[i + 1], kernel_sizes[i]
        key, k1, k2 = jax.random.split(key, 3)
        w = 0.1 * jax.random.normal(k1, (k, k, c_in, c_out), jnp.float32)
        b = 0.1 * jax.random.normal(k2, (c_out,), jnp.float32)
        params["conv"].append((w, b, jnp.ones((c_out,), jnp.float32),
                               jnp.zeros((c_out,), jnp.float32)))
    for i in range(len(hidden_dims) - 1):
        d_in, d_out = hidden_dims[i], hidden_dims[i + 1]
        key, k1, k2 = jax.random.split(key, 3)
        w = 0.1 * jax.random.normal(k1, (d_in, d_out), jnp.float32)
        b = 0.1 * jax.random.normal(k2, (d_out,), jnp.float32)
        params["dense"].append((w, b))
    return params


def reference_forward(x_nchw, params, kernel_sizes, strides, eps=1e-5):
    """Pure-JAX reference matching PyTorch training-mode semantics."""
    x = x_nchw.astype(jnp.float32)
    for (w, b, gamma, beta), k, s in zip(params["conv"], kernel_sizes, strides):
        _, _, h, wd = x.shape
        oh = (h - k) // s + 1
        ow = (wd - k) // s + 1
        y = jnp.zeros((x.shape[0], w.shape[-1], oh, ow), jnp.float32)
        for di in range(k):
            for dj in range(k):
                patch = x[:, :, di:di + s * oh:s, dj:dj + s * ow:s]
                y = y + jnp.einsum("nchw,cd->ndhw", patch, w[di, dj],
                                   precision=jax.lax.Precision.HIGHEST)
        y = y + b[None, :, None, None]
        mean = jnp.mean(y, axis=(0, 2, 3), keepdims=True)
        var = jnp.mean((y - mean) ** 2, axis=(0, 2, 3), keepdims=True)
        y = ((y - mean) * jax.lax.rsqrt(var + eps)
             * gamma[None, :, None, None] + beta[None, :, None, None])
        x = jnp.maximum(y, 0.0)
    x = x.reshape(x.shape[0], -1)
    for (w, b) in params["dense"]:
        x = jnp.maximum(
            jnp.dot(x, w, precision=jax.lax.Precision.HIGHEST) + b, 0.0)
    return x


# ----------------------------------------------------------------------------
if __name__ == "__main__":
    # Module config: channels=[4, 8], kernel_sizes=[3, 3], strides=[2, 2]
    # Input 16x16 -> 7x7 -> 3x3 ; flatten = 8*3*3 = 72 -> dense 72->32->16.
    channels = [4, 8]
    kernel_sizes = [3, 3]
    strides = [2, 2]
    hidden_dims = [72, 32, 16]

    key = jax.random.PRNGKey(0)
    key, xkey = jax.random.split(key)
    x = jax.random.normal(xkey, (2, 3, 16, 16), jnp.float32)   # NCHW (PyTorch)

    params = init_params(key, channels, kernel_sizes, hidden_dims)

    # Eager, one-time packing of weights + constant selection matrices.
    blob, spec = pack_cnn_encoder_params(
        params, kernel_sizes, strides, input_chw=(3, 16, 16), batch=2)

    fwd = jax.jit(functools.partial(cnn_encoder_apply, spec=spec))
    out = jax.block_until_ready(fwd(x, blob))

    assert out.shape == (2, hidden_dims[-1]), out.shape
    assert bool(jnp.all(jnp.isfinite(out)))

    ref = jax.block_until_ready(
        reference_forward(x, params, kernel_sizes, strides))
    assert jnp.allclose(out, ref, rtol=5e-2, atol=1e-2), \
        float(jnp.max(jnp.abs(out - ref)))

    print("KERNEL_OK")
</pallas_src>

<mosaic_0001>
module attributes {stable_mosaic.version = 11 : i64} {
  func.func @kernel(%arg0: memref<96x16xf32, #tpu.memory_space<vmem>>, %arg1: memref<376x84xf32, #tpu.memory_space<vmem>>, %arg2: memref<2x16xf32, #tpu.memory_space<vmem>>) attributes {dimension_semantics = [], scalar_prefetch = 0 : i64, scratch_operands = 0 : i64, tpu.core_type = #tpu.core_type<tc>} {
    %c0 = arith.constant 0 : index
    %c0_0 = arith.constant 0 : index
    %0 = vector.load %arg0[%c0, %c0_0] : memref<96x16xf32, #tpu.memory_space<vmem>>, vector<16x16xf32>
    %c48 = arith.constant 48 : index
    %c0_1 = arith.constant 0 : index
    %1 = vector.load %arg0[%c48, %c0_1] : memref<96x16xf32, #tpu.memory_space<vmem>>, vector<16x16xf32>
    %2 = tpu.concatenate %0, %1 in 0 : vector<16x16xf32>, vector<16x16xf32> -> vector<32x16xf32>
    %c16 = arith.constant 16 : index
    %c0_2 = arith.constant 0 : index
    %3 = vector.load %arg0[%c16, %c0_2] : memref<96x16xf32, #tpu.memory_space<vmem>>, vector<16x16xf32>
    %c64 = arith.constant 64 : index
    %c0_3 = arith.constant 0 : index
    %4 = vector.load %arg0[%c64, %c0_3] : memref<96x16xf32, #tpu.memory_space<vmem>>, vector<16x16xf32>
    %5 = tpu.concatenate %3, %4 in 0 : vector<16x16xf32>, vector<16x16xf32> -> vector<32x16xf32>
    %c32 = arith.constant 32 : index
    %c0_4 = arith.constant 0 : index
    %6 = vector.load %arg0[%c32, %c0_4] : memref<96x16xf32, #tpu.memory_space<vmem>>, vector<16x16xf32>
    %c80 = arith.constant 80 : index
    %c0_5 = arith.constant 0 : index
    %7 = vector.load %arg0[%c80, %c0_5] : memref<96x16xf32, #tpu.memory_space<vmem>>, vector<16x16xf32>
    %8 = tpu.concatenate %6, %7 in 0 : vector<16x16xf32>, vector<16x16xf32> -> vector<32x16xf32>
    %9 = tpu.concatenate %2, %5, %8 in 1 : vector<32x16xf32>, vector<32x16xf32>, vector<32x16xf32> -> vector<32x48xf32>
    %c0_6 = arith.constant 0 : index
    %c0_7 = arith.constant 0 : index
    %10 = vector.load %arg1[%c0_6, %c0_7] : memref<376x84xf32, #tpu.memory_space<vmem>>, vector<48x84xf32>
    %cst = arith.constant dense<0.000000e+00> : vector<32x84xf32>
    %11 = tpu.matmul %9, %10, %cst {dimension_numbers = #tpu.dot_dimension_numbers<[1], [0], [0], [1], [0, 0, 1, 1], [], []>} : vector<32x48xf32>, vector<48x84xf32>, vector<32x84xf32> -> vector<32x84xf32>
    %c48_8 = arith.constant 48 : index
    %c0_9 = arith.constant 0 : index
    %12 = vector.load %arg1[%c48_8, %c0_9] : memref<376x84xf32, #tpu.memory_space<vmem>>, vector<14x32xf32>
    %13 = vector.extract_strided_slice %11 {offsets = [0, 0], sizes = [32, 28], strides = [1, 1]} : vector<32x84xf32> to vector<32x28xf32>
    %cst_10 = arith.constant dense<0.000000e+00> : vector<14x28xf32>
    %14 = tpu.matmul %12, %13, %cst_10 {dimension_numbers = #tpu.dot_dimension_numbers<[1], [0], [0], [1], [0, 0, 1, 1], [], []>} : vector<14x32xf32>, vector<32x28xf32>, vector<14x28xf32> -> vector<14x28xf32>
    %c64_11 = arith.constant 64 : index
    %c0_12 = arith.constant 0 : index
    %15 = vector.load %arg1[%c64_11, %c0_12] : memref<376x84xf32, #tpu.memory_space<vmem>>, vector<14x32xf32>
    %16 = vector.extract_strided_slice %11 {offsets = [0, 28], sizes = [32, 28], strides = [1, 1]} : vector<32x84xf32> to vector<32x28xf32>
    %cst_13 = arith.constant dense<0.000000e+00> : vector<14x28xf32>
    %17 = tpu.matmul %15, %16, %cst_13 {dimension_numbers = #tpu.dot_dimension_numbers<[1], [0], [0], [1], [0, 0, 1, 1], [], []>} : vector<14x32xf32>, vector<32x28xf32>, vector<14x28xf32> -> vector<14x28xf32>
    %18 = arith.addf %14, %17 : vector<14x28xf32>
    %c80_14 = arith.constant 80 : index
    %c0_15 = arith.constant 0 : index
    %19 = vector.load %arg1[%c80_14, %c0_15] : memref<376x84xf32, #tpu.memory_space<vmem>>, vector<14x32xf32>
    %20 = vector.extract_strided_slice %11 {offsets = [0, 56], sizes = [32, 28], strides = [1, 1]} : vector<32x84xf32> to vector<32x28xf32>
    %cst_16 = arith.constant dense<0.000000e+00> : vector<14x28xf32>
    %21 = tpu.matmul %19, %20, %cst_16 {dimension_numbers = #tpu.dot_dimension_numbers<[1], [0], [0], [1], [0, 0, 1, 1], [], []>} : vector<14x32xf32>, vector<32x28xf32>, vector<14x28xf32> -> vector<14x28xf32>
    %22 = arith.addf %18, %21 : vector<14x28xf32>
    %c96 = arith.constant 96 : index
    %c0_17 = arith.constant 0 : index
    %23 = vector.load %arg1[%c96, %c0_17] : memref<376x84xf32, #tpu.memory_space<vmem>>, vector<28x4xf32>
    %c128 = arith.constant 128 : index
    %c0_18 = arith.constant 0 : index
    %24 = vector.load %arg1[%c128, %c0_18] : memref<376x84xf32, #tpu.memory_space<vmem>>, vector<4x28xf32>
    %cst_19 = arith.constant dense<0.000000e+00> : vector<28xf32>
    %25 = vector.multi_reduction <add>, %22, %cst_19 [0] : vector<14x28xf32> to vector<28xf32>
    %26 = vector.shape_cast %25 : vector<28xf32> to vector<1x28xf32>
    %cst_20 = arith.constant dense<0.000000e+00> : vector<1x4xf32>
    %27 = tpu.matmul %26, %23, %cst_20 {dimension_numbers = #tpu.dot_dimension_numbers<[1], [0], [0], [1], [0, 0, 1, 1], [], []>} : vector<1x28xf32>, vector<28x4xf32>, vector<1x4xf32> -> vector<1x4xf32>
    %cst_21 = arith.constant 9.800000e+01 : f32
    %28 = vector.broadcast %cst_21 : f32 to vector<1x4xf32>
    %29 = arith.divf %27, %28 : vector<1x4xf32>
    %cst_22 = arith.constant dense<0.000000e+00> : vector<1x28xf32>
    %30 = tpu.matmul %29, %24, %cst_22 {dimension_numbers = #tpu.dot_dimension_numbers<[1], [0], [0], [1], [0, 0, 1, 1], [], []>} : vector<1x4xf32>, vector<4x28xf32>, vector<1x28xf32> -> vector<1x28xf32>
    %31 = vector.broadcast %30 : vector<1x28xf32> to vector<14x28xf32>
    %32 = arith.subf %22, %31 : vector<14x28xf32>
    %33 = arith.mulf %32, %32 : vector<14x28xf32>
    %cst_23 = arith.constant dense<0.000000e+00> : vector<28xf32>
    %34 = vector.multi_reduction <add>, %33, %cst_23 [0] : vector<14x28xf32> to vector<28xf32>
    %35 = vector.shape_cast %34 : vector<28xf32> to vector<1x28xf32>
    %cst_24 = arith.constant dense<0.000000e+00> : vector<1x4xf32>
    %36 = tpu.matmul %35, %23, %cst_24 {dimension_numbers = #tpu.dot_dimension_numbers<[1], [0], [0], [1], [0, 0, 1, 1], [], []>} : vector<1x28xf32>, vector<28x4xf32>, vector<1x4xf32> -> vector<1x4xf32>
    %cst_25 = arith.constant 9.800000e+01 : f32
    %37 = vector.broadcast %cst_25 : f32 to vector<1x4xf32>
    %38 = arith.divf %36, %37 : vector<1x4xf32>
    %c136 = arith.constant 136 : index
    %c0_26 = arith.constant 0 : index
    %39 = vector.load %arg1[%c136, %c0_26] : memref<376x84xf32, #tpu.memory_space<vmem>>, vector<1x4xf32>
    %cst_27 = arith.constant 9.99999974E-6 : f32
    %40 = vector.broadcast %cst_27 : f32 to vector<1x4xf32>
    %41 = arith.addf %38, %40 : vector<1x4xf32>
    %42 = math.rsqrt %41 : vector<1x4xf32>
    %43 = arith.mulf %39, %42 : vector<1x4xf32>
    %cst_28 = arith.constant dense<0.000000e+00> : vector<1x28xf32>
    %44 = tpu.matmul %43, %24, %cst_28 {dimension_numbers = #tpu.dot_dimension_numbers<[1], [0], [0], [1], [0, 0, 1, 1], [], []>} : vector<1x4xf32>, vector<4x28xf32>, vector<1x28xf32> -> vector<1x28xf32>
    %c144 = arith.constant 144 : index
    %c0_29 = arith.constant 0 : index
    %45 = vector.load %arg1[%c144, %c0_29] : memref<376x84xf32, #tpu.memory_space<vmem>>, vector<1x4xf32>
    %cst_30 = arith.constant dense<0.000000e+00> : vector<1x28xf32>
    %46 = tpu.matmul %45, %24, %cst_30 {dimension_numbers = #tpu.dot_dimension_numbers<[1], [0], [0], [1], [0, 0, 1, 1], [], []>} : vector<1x4xf32>, vector<4x28xf32>, vector<1x28xf32> -> vector<1x28xf32>
    %47 = vector.broadcast %44 : vector<1x28xf32> to vector<14x28xf32>
    %48 = arith.mulf %32, %47 : vector<14x28xf32>
    %49 = vector.broadcast %46 : vector<1x28xf32> to vector<14x28xf32>
    %50 = arith.addf %48, %49 : vector<14x28xf32>
    %cst_31 = arith.constant 0.000000e+00 : f32
    %51 = vector.broadcast %cst_31 : f32 to vector<14x28xf32>
    %52 = arith.maximumf %50, %51 : vector<14x28xf32>
    %c152 = arith.constant 152 : index
    %c0_32 = arith.constant 0 : index
    %53 = vector.load %arg1[%c152, %c0_32] : memref<376x84xf32, #tpu.memory_space<vmem>>, vector<28x72xf32>
    %cst_33 = arith.constant dense<0.000000e+00> : vector<14x72xf32>
    %54 = tpu.matmul %52, %53, %cst_33 {dimension_numbers = #tpu.dot_dimension_numbers<[1], [0], [0], [1], [0, 0, 1, 1], [], []>} : vector<14x28xf32>, vector<28x72xf32>, vector<14x72xf32> -> vector<14x72xf32>
    %c184 = arith.constant 184 : index
    %c0_34 = arith.constant 0 : index
    %55 = vector.load %arg1[%c184, %c0_34] : memref<376x84xf32, #tpu.memory_space<vmem>>, vector<6x14xf32>
    %56 = vector.extract_strided_slice %54 {offsets = [0, 0], sizes = [14, 24], strides = [1, 1]} : vector<14x72xf32> to vector<14x24xf32>
    %cst_35 = arith.constant dense<0.000000e+00> : vector<6x24xf32>
    %57 = tpu.matmul %55, %56, %cst_35 {dimension_numbers = #tpu.dot_dimension_numbers<[1], [0], [0], [1], [0, 0, 1, 1], [], []>} : vector<6x14xf32>, vector<14x24xf32>, vector<6x24xf32> -> vector<6x24xf32>
    %c192 = arith.constant 192 : index
    %c0_36 = arith.constant 0 : index
    %58 = vector.load %arg1[%c192, %c0_36] : memref<376x84xf32, #tpu.memory_space<vmem>>, vector<6x14xf32>
    %59 = vector.extract_strided_slice %54 {offsets = [0, 24], sizes = [14, 24], strides = [1, 1]} : vector<14x72xf32> to vector<14x24xf32>
    %cst_37 = arith.constant dense<0.000000e+00> : vector<6x24xf32>
    %60 = tpu.matmul %58, %59, %cst_37 {dimension_numbers = #tpu.dot_dimension_numbers<[1], [0], [0], [1], [0, 0, 1, 1], [], []>} : vector<6x14xf32>, vector<14x24xf32>, vector<6x24xf32> -> vector<6x24xf32>
    %61 = arith.addf %57, %60 : vector<6x24xf32>
    %c200 = arith.constant 200 : index
    %c0_38 = arith.constant 0 : index
    %62 = vector.load %arg1[%c200, %c0_38] : memref<376x84xf32, #tpu.memory_space<vmem>>, vector<6x14xf32>
    %63 = vector.extract_strided_slice %54 {offsets = [0, 48], sizes = [14, 24], strides = [1, 1]} : vector<14x72xf32> to vector<14x24xf32>
    %cst_39 = arith.constant dense<0.000000e+00> : vector<6x24xf32>
    %64 = tpu.matmul %62, %63, %cst_39 {dimension_numbers = #tpu.dot_dimension_numbers<[1], [0], [0], [1], [0, 0, 1, 1], [], []>} : vector<6x14xf32>, vector<14x24xf32>, vector<6x24xf32> -> vector<6x24xf32>
    %65 = arith.addf %61, %64 : vector<6x24xf32>
    %c208 = arith.constant 208 : index
    %c0_40 = arith.constant 0 : index
    %66 = vector.load %arg1[%c208, %c0_40] : memref<376x84xf32, #tpu.memory_space<vmem>>, vector<24x8xf32>
    %c232 = arith.constant 232 : index
    %c0_41 = arith.constant 0 : index
    %67 = vector.load %arg1[%c232, %c0_41] : memref<376x84xf32, #tpu.memory_space<vmem>>, vector<8x24xf32>
    %cst_42 = arith.constant dense<0.000000e+00> : vector<24xf32>
    %68 = vector.multi_reduction <add>, %65, %cst_42 [0] : vector<6x24xf32> to vector<24xf32>
    %69 = vector.shape_cast %68 : vector<24xf32> to vector<1x24xf32>
    %cst_43 = arith.constant dense<0.000000e+00> : vector<1x8xf32>
    %70 = tpu.matmul %69, %66, %cst_43 {dimension_numbers = #tpu.dot_dimension_numbers<[1], [0], [0], [1], [0, 0, 1, 1], [], []>} : vector<1x24xf32>, vector<24x8xf32>, vector<1x8xf32> -> vector<1x8xf32>
    %cst_44 = arith.constant 1.800000e+01 : f32
    %71 = vector.broadcast %cst_44 : f32 to vector<1x8xf32>
    %72 = arith.divf %70, %71 : vector<1x8xf32>
    %cst_45 = arith.constant dense<0.000000e+00> : vector<1x24xf32>
    %73 = tpu.matmul %72, %67, %cst_45 {dimension_numbers = #tpu.dot_dimension_numbers<[1], [0], [0], [1], [0, 0, 1, 1], [], []>} : vector<1x8xf32>, vector<8x24xf32>, vector<1x24xf32> -> vector<1x24xf32>
    %74 = vector.broadcast %73 : vector<1x24xf32> to vector<6x24xf32>
    %75 = arith.subf %65, %74 : vector<6x24xf32>
    %76 = arith.mulf %75, %75 : vector<6x24xf32>
    %cst_46 = arith.constant dense<0.000000e+00> : vector<24xf32>
    %77 = vector.multi_reduction <add>, %76, %cst_46 [0] : vector<6x24xf32> to vector<24xf32>
    %78 = vector.shape_cast %77 : vector<24xf32> to vector<1x24xf32>
    %cst_47 = arith.constant dense<0.000000e+00> : vector<1x8xf32>
    %79 = tpu.matmul %78, %66, %cst_47 {dimension_numbers = #tpu.dot_dimension_numbers<[1], [0], [0], [1], [0, 0, 1, 1], [], []>} : vector<1x24xf32>, vector<24x8xf32>, vector<1x8xf32> -> vector<1x8xf32>
    %cst_48 = arith.constant 1.800000e+01 : f32
    %80 = vector.broadcast %cst_48 : f32 to vector<1x8xf32>
    %81 = arith.divf %79, %80 : vector<1x8xf32>
    %c240 = arith.constant 240 : index
    %c0_49 = arith.constant 0 : index
    %82 = vector.load %arg1[%c240, %c0_49] : memref<376x84xf32, #tpu.memory_space<vmem>>, vector<1x8xf32>
    %cst_50 = arith.constant 9.99999974E-6 : f32
    %83 = vector.broadcast %cst_50 : f32 to vector<1x8xf32>
    %84 = arith.addf %81, %83 : vector<1x8xf32>
    %85 = math.rsqrt %84 : vector<1x8xf32>
    %86 = arith.mulf %82, %85 : vector<1x8xf32>
    %cst_51 = arith.constant dense<0.000000e+00> : vector<1x24xf32>
    %87 = tpu.matmul %86, %67, %cst_51 {dimension_numbers = #tpu.dot_dimension_numbers<[1], [0], [0], [1], [0, 0, 1, 1], [], []>} : vector<1x8xf32>, vector<8x24xf32>, vector<1x24xf32> -> vector<1x24xf32>
    %c248 = arith.constant 248 : index
    %c0_52 = arith.constant 0 : index
    %88 = vector.load %arg1[%c248, %c0_52] : memref<376x84xf32, #tpu.memory_space<vmem>>, vector<1x8xf32>
    %cst_53 = arith.constant dense<0.000000e+00> : vector<1x24xf32>
    %89 = tpu.matmul %88, %67, %cst_53 {dimension_numbers = #tpu.dot_dimension_numbers<[1], [0], [0], [1], [0, 0, 1, 1], [], []>} : vector<1x8xf32>, vector<8x24xf32>, vector<1x24xf32> -> vector<1x24xf32>
    %90 = vector.broadcast %87 : vector<1x24xf32> to vector<6x24xf32>
    %91 = arith.mulf %75, %90 : vector<6x24xf32>
    %92 = vector.broadcast %89 : vector<1x24xf32> to vector<6x24xf32>
    %93 = arith.addf %91, %92 : vector<6x24xf32>
    %cst_54 = arith.constant 0.000000e+00 : f32
    %94 = vector.broadcast %cst_54 : f32 to vector<6x24xf32>
    %95 = arith.maximumf %93, %94 : vector<6x24xf32>
    %96 = vector.extract_strided_slice %95 {offsets = [0, 0], sizes = [1, 24], strides = [1, 1]} : vector<6x24xf32> to vector<1x24xf32>
    %97 = vector.extract_strided_slice %95 {offsets = [3, 0], sizes = [1, 24], strides = [1, 1]} : vector<6x24xf32> to vector<1x24xf32>
    %98 = tpu.concatenate %96, %97 in 0 : vector<1x24xf32>, vector<1x24xf32> -> vector<2x24xf32>
    %99 = vector.extract_strided_slice %95 {offsets = [1, 0], sizes = [1, 24], strides = [1, 1]} : vector<6x24xf32> to vector<1x24xf32>
    %100 = vector.extract_strided_slice %95 {offsets = [4, 0], sizes = [1, 24], strides = [1, 1]} : vector<6x24xf32> to vector<1x24xf32>
    %101 = tpu.concatenate %99, %100 in 0 : vector<1x24xf32>, vector<1x24xf32> -> vector<2x24xf32>
    %102 = vector.extract_strided_slice %95 {offsets = [2, 0], sizes = [1, 24], strides = [1, 1]} : vector<6x24xf32> to vector<1x24xf32>
    %103 = vector.extract_strided_slice %95 {offsets = [5, 0], sizes = [1, 24], strides = [1, 1]} : vector<6x24xf32> to vector<1x24xf32>
    %104 = tpu.concatenate %102, %103 in 0 : vector<1x24xf32>, vector<1x24xf32> -> vector<2x24xf32>
    %105 = tpu.concatenate %98, %101, %104 in 1 : vector<2x24xf32>, vector<2x24xf32>, vector<2x24xf32> -> vector<2x72xf32>
    %c256 = arith.constant 256 : index
    %c0_55 = arith.constant 0 : index
    %106 = vector.load %arg1[%c256, %c0_55] : memref<376x84xf32, #tpu.memory_space<vmem>>, vector<72x32xf32>
    %cst_56 = arith.constant dense<0.000000e+00> : vector<2x32xf32>
    %107 = tpu.matmul %105, %106, %cst_56 {dimension_numbers = #tpu.dot_dimension_numbers<[1], [0], [0], [1], [0, 0, 1, 1], [], []>} : vector<2x72xf32>, vector<72x32xf32>, vector<2x32xf32> -> vector<2x32xf32>
    %c328 = arith.constant 328 : index
    %c0_57 = arith.constant 0 : index
    %108 = vector.load %arg1[%c328, %c0_57] : memref<376x84xf32, #tpu.memory_space<vmem>>, vector<1x32xf32>
    %109 = vector.broadcast %108 : vector<1x32xf32> to vector<2x32xf32>
    %110 = arith.addf %107, %109 : vector<2x32xf32>
    %cst_58 = arith.constant 0.000000e+00 : f32
    %111 = vector.broadcast %cst_58 : f32 to vector<2x32xf32>
    %112 = arith.maximumf %110, %111 : vector<2x32xf32>
    %c336 = arith.constant 336 : index
    %c0_59 = arith.constant 0 : index
    %113 = vector.load %arg1[%c336, %c0_59] : memref<376x84xf32, #tpu.memory_space<vmem>>, vector<32x16xf32>
    %cst_60 = arith.constant dense<0.000000e+00> : vector<2x16xf32>
    %114 = tpu.matmul %112, %113, %cst_60 {dimension_numbers = #tpu.dot_dimension_numbers<[1], [0], [0], [1], [0, 0, 1, 1], [], []>} : vector<2x32xf32>, vector<32x16xf32>, vector<2x16xf32> -> vector<2x16xf32>
    %c368 = arith.constant 368 : index
    %c0_61 = arith.constant 0 : index
    %115 = vector.load %arg1[%c368, %c0_61] : memref<376x84xf32, #tpu.memory_space<vmem>>, vector<1x16xf32>
    %116 = vector.broadcast %115 : vector<1x16xf32> to vector<2x16xf32>
    %117 = arith.addf %114, %116 : vector<2x16xf32>
    %cst_62 = arith.constant 0.000000e+00 : f32
    %118 = vector.broadcast %cst_62 : f32 to vector<2x16xf32>
    %119 = arith.maximumf %117, %118 : vector<2x16xf32>
    %c0_63 = arith.constant 0 : index
    %c0_64 = arith.constant 0 : index
    %120 = vector.load %arg2[%c0_63, %c0_64] : memref<2x16xf32, #tpu.memory_space<vmem>>, vector<2x16xf32>
    tpu.vector_store %arg2[%c0_63, %c0_64], %119 {strides = array<i32>} : memref<2x16xf32, #tpu.memory_space<vmem>>, vector<2x16xf32>,
    return
  }
}

</mosaic_0001>

<llo_original>
// kernel: cnn_encoder_apply.1
$region0: #{cnn_encoder_apply.1}
  #allocation0 [shape = 'u32[]', space=smem, size = 0x4, offset = 0x4, fixed_abs, tag = 'smem constant byte address 0x4 - core index']
  #allocation1 [shape = 'u32[72,128]{1,0:T(1,128)}', space=vmem, size = 0x9000, scoped, tag = 'internal scratch']
  %s0 = inlined_call_operand.vmem [shape: f32[96,16], index: 0, kind: input, shape index: {}]
  %s1 = inlined_call_operand.vmem [shape: f32[376,84], index: 1, kind: input, shape index: {}]
  %s2 = inlined_call_operand.hbm [shape: f32[2,16], index: 2, kind: output, shape index: {}]
  %s3 = sld [smem:[#allocation0]]
  $region18: #{cnn_encoder_apply.1} parent=0
    _
  %s5 = ssub.s32 1, %s3
  %s6 = scalar_select 0, %s5, %s3
  $region1: #{cnn_encoder_apply.1} parent=0
    #allocation2 [shape = 'u8[1024]{0}', space=vmem, size = 0x400, scoped, tag = 'output window, operand 0, single buffered']
    #allocation3 [shape = 's32[1]{0}', space=sflag, size = 0x4, scoped, tag = 'scoped memory for cnn_encoder_apply.1']
    %7 = vsyncpa [#allocation3], 0
    // Predicated region
    $region2: #{cnn_encoder_apply.1} parent=1 // pred_check
      _
    $region3: #{cnn_encoder_apply.1} parent=1 // pred_check_branch
      %9 = sbr.rel (0) target = $region5
    $region4: #{cnn_encoder_apply.1} parent=1 // pred_region
      _
    $region5: #{cnn_encoder_apply.1} parent=1 // pred_fallthru
      _
    // Predicated region
    $region6: #{cnn_encoder_apply.1} parent=1 // pred_check
      _
    $region7: #{cnn_encoder_apply.1} parent=1 // pred_check_branch
      %11 = sbr.rel (0) target = $region9
    $region8: #{cnn_encoder_apply.1} parent=1 // pred_region
      _
    $region9: #{cnn_encoder_apply.1} parent=1 // pred_fallthru
      _
    %v12 = vld [vmem:[%s0] sm:$0xff]
    %v13 = vld [vmem:[%s0 + $0x8] sm:$0xff]
    %v14 = vld [vmem:[%s0 + $0x30] sm:$0xff]
    %v15 = vld [vmem:[%s0 + $0x38] sm:$0xff]
    %v16 = vld [vmem:[%s0 + $0x10] sm:$0xff]
    %v17 = vld [vmem:[%s0 + $0x18] sm:$0xff]
    %v18 = vld [vmem:[%s0 + $0x40] sm:$0xff]
    %v19 = vld [vmem:[%s0 + $0x48] sm:$0xff]
    %v20 = vld [vmem:[%s0 + $0x20] sm:$0xff]
    %v21 = vld [vmem:[%s0 + $0x28] sm:$0xff]
    %v22 = vld [vmem:[%s0 + $0x50] sm:$0xff]
    %v23 = vld [vmem:[%s0 + $0x58] sm:$0xff]
    %28 = vrot.lane.b32.xlu0 %v16, 16
    %v29 = vpop.permute.xlu0 %28
    %30 = vrot.lane.b32.xlu0 %v17, 16
    %v31 = vpop.permute.xlu0 %30
    %32 = vrot.lane.b32.xlu0 %v18, 16
    %v33 = vpop.permute.xlu0 %32
    %34 = vrot.lane.b32.xlu0 %v19, 16
    %v35 = vpop.permute.xlu0 %34
    %44 = vrot.lane.b32.xlu0 %v20, 32
    %v45 = vpop.permute.xlu0 %44
    %46 = vrot.lane.b32.xlu0 %v21, 32
    %v47 = vpop.permute.xlu0 %46
    %48 = vrot.lane.b32.xlu0 %v22, 32
    %v49 = vpop.permute.xlu0 %48
    %50 = vrot.lane.b32.xlu0 %v23, 32
    %v51 = vpop.permute.xlu0 %50
    %vm56 = vcmask 130048
    %v57 = vsel %vm56, %v12, %v29
    %v58 = vsel %vm56, %v13, %v31
    %v59 = vsel %vm56, %v14, %v33
    %v60 = vsel %vm56, %v15, %v35
    %vm61 = vcmask 261120
    %v62 = vsel %vm61, %v57, %v45
    %v63 = vsel %vm61, %v58, %v47
    %v64 = vsel %vm61, %v59, %v49
    %v65 = vsel %vm61, %v60, %v51
    %v66 = vld [vmem:[%s1] sm:$0xff]
    %v67 = vld [vmem:[%s1 + $0x8] sm:$0xff]
    %v68 = vld [vmem:[%s1 + $0x10] sm:$0xff]
    %v69 = vld [vmem:[%s1 + $0x18] sm:$0xff]
    %v70 = vld [vmem:[%s1 + $0x20] sm:$0xff]
    %v71 = vld [vmem:[%s1 + $0x28] sm:$0xff]
    %vm72 = vcmask 392192
    %v74 = vsel %vm72, %v62, 0
    %v77 = vsel %vm72, %v63, 0
    %v80 = vsel %vm72, %v64, 0
    %v83 = vsel %vm72, %v65, 0
    %85 = vmatpush.msra.mxu0 0.0
    %86 = vmatpush.msra.mxu0 0.0
    %87 = vmatpush.msra.mxu0 0.0
    %88 = vmatpush.msra.mxu0 0.0
    %89 = vmatpush.msra.mxu0 0.0
    %90 = vmatpush.msra.mxu0 0.0
    %91 = vmatpush.msra.mxu0 0.0
    %92 = vmatpush.msra.mxu0 0.0
    %93 = vmatpush.msra.mxu0 0.0
    %94 = vmatpush.msra.mxu0 0.0
    %95 = vmatpush.msra.mxu0 %v71
    %96 = vmatpush.msra.mxu0 %v70
    %97 = vmatpush.msra.mxu0 %v69
    %98 = vmatpush.msra.mxu0 %v68
    %99 = vmatpush.msra.mxu0 %v67
    %100 = vmatpush.msra.mxu0 %v66
    %101 = vmatmul.f32.gmra.mxu0 %v74
    %v102 = vpop.f32.mrf.mxu0
    %v103 = vadd.f32 0.0, %v102
    %104 = vmatmul.f32.gmra.mxu0 %v77
    %v105 = vpop.f32.mrf.mxu0
    %v106 = vadd.f32 0.0, %v105
    %107 = vmatmul.f32.gmra.mxu0 %v80
    %v108 = vpop.f32.mrf.mxu0
    %v109 = vadd.f32 0.0, %v108
    %110 = vmatmul.f32.gmra.mxu0 %v83
    %v111 = vpop.f32.mrf.mxu0
    %v112 = vadd.f32 0.0, %v111
    %113 = vdwg.mxu0
    %v114 = vld [vmem:[%s1 + $0x30] sm:$0xff]
    %v115 = vld [vmem:[%s1 + $0x38] sm:$0x3f]
    %v116 = vld [vmem:[%s1 + $0x40] sm:$0xff]
    %v117 = vld [vmem:[%s1 + $0x48] sm:$0x3f]
    %122 = vrot.lane.b32.xlu0 %v103, 100
    %v123 = vpop.permute.xlu0 %122
    %124 = vrot.lane.b32.xlu0 %v106, 100
    %v125 = vpop.permute.xlu0 %124
    %126 = vrot.lane.b32.xlu0 %v109, 100
    %v127 = vpop.permute.xlu0 %126
    %128 = vrot.lane.b32.xlu0 %v112, 100
    %v129 = vpop.permute.xlu0 %128
    %v135 = vsel %vm61, %v116, 0
    %v138 = vsel %vm61, %v117, 0
    %140 = vmatpush.msra.mxu0 0.0
    %141 = vmatpush.msra.mxu0 0.0
    %142 = vmatpush.msra.mxu0 0.0
    %143 = vmatpush.msra.mxu0 0.0
    %144 = vmatpush.msra.mxu0 0.0
    %145 = vmatpush.msra.mxu0 0.0
    %146 = vmatpush.msra.mxu0 0.0
    %147 = vmatpush.msra.mxu0 0.0
    %148 = vmatpush.msra.mxu0 0.0
    %149 = vmatpush.msra.mxu0 0.0
    %150 = vmatpush.msra.mxu0 0.0
    %151 = vmatpush.msra.mxu0 0.0
    %152 = vmatpush.msra.mxu0 %v129
    %153 = vmatpush.msra.mxu0 %v127
    %154 = vmatpush.msra.mxu0 %v125
    %155 = vmatpush.msra.mxu0 %v123
    %156 = vmatmul.f32.gmra.mxu0 %v135
    %v157 = vpop.f32.mrf.mxu0
    %v158 = vadd.f32 0.0, %v157
    %159 = vmatmul.f32.gmra.mxu0 %v138
    %v160 = vpop.f32.mrf.mxu0
    %v161 = vadd.f32 0.0, %v160
    %162 = vdwg.mxu0
    %v164 = vsel %vm61, %v114, 0
    %v167 = vsel %vm61, %v115, 0
    %169 = vmatpush.msra.mxu0 0.0
    %170 = vmatpush.msra.mxu0 0.0
    %171 = vmatpush.msra.mxu0 0.0
    %172 = vmatpush.msra.mxu0 0.0
    %173 = vmatpush.msra.mxu0 0.0
    %174 = vmatpush.msra.mxu0 0.0
    %175 = vmatpush.msra.mxu0 0.0
    %176 = vmatpush.msra.mxu0 0.0
    %177 = vmatpush.msra.mxu0 0.0
    %178 = vmatpush.msra.mxu0 0.0
    %179 = vmatpush.msra.mxu0 0.0
    %180 = vmatpush.msra.mxu0 0.0
    %181 = vmatpush.msra.mxu0 %v112
    %182 = vmatpush.msra.mxu0 %v109
    %183 = vmatpush.msra.mxu0 %v106
    %184 = vmatpush.msra.mxu0 %v103
    %185 = vmatmul.f32.gmra.mxu0 %v164
    %v186 = vpop.f32.mrf.mxu0
    %v187 = vadd.f32 %v158, %v186
    %188 = vmatmul.f32.gmra.mxu0 %v167
    %v189 = vpop.f32.mrf.mxu0
    %v190 = vadd.f32 %v161, %v189
    %191 = vdwg.mxu0
    %v192 = vld [vmem:[%s1 + $0x50] sm:$0xff]
    %v193 = vld [vmem:[%s1 + $0x58] sm:$0x3f]
    %194 = vrot.lane.b32.xlu0 %v103, 72
    %v195 = vpop.permute.xlu0 %194
    %196 = vrot.lane.b32.xlu0 %v106, 72
    %v197 = vpop.permute.xlu0 %196
    %198 = vrot.lane.b32.xlu0 %v109, 72
    %v199 = vpop.permute.xlu0 %198
    %200 = vrot.lane.b32.xlu0 %v112, 72
    %v201 = vpop.permute.xlu0 %200
    %v207 = vsel %vm61, %v192, 0
    %v210 = vsel %vm61, %v193, 0
    %212 = vmatpush.msra.mxu0 0.0
    %213 = vmatpush.msra.mxu0 0.0
    %214 = vmatpush.msra.mxu0 0.0
    %215 = vmatpush.msra.mxu0 0.0
    %216 = vmatpush.msra.mxu0 0.0
    %217 = vmatpush.msra.mxu0 0.0
    %218 = vmatpush.msra.mxu0 0.0
    %219 = vmatpush.msra.mxu0 0.0
    %220 = vmatpush.msra.mxu0 0.0
    %221 = vmatpush.msra.mxu0 0.0
    %222 = vmatpush.msra.mxu0 0.0
    %223 = vmatpush.msra.mxu0 0.0
    %224 = vmatpush.msra.mxu0 %v201
    %225 = vmatpush.msra.mxu0 %v199
    %226 = vmatpush.msra.mxu0 %v197
    %227 = vmatpush.msra.mxu0 %v195
    %228 = vmatmul.f32.gmra.mxu0 %v207
    %v229 = vpop.f32.mrf.mxu0
    %v230 = vadd.f32 0.0, %v229
    %231 = vmatmul.f32.gmra.mxu0 %v210
    %v232 = vpop.f32.mrf.mxu0
    %v233 = vadd.f32 0.0, %v232
    %234 = vdwg.mxu0
    %v235 = vadd.f32 %v187, %v230
    %v236 = vadd.f32 %v190, %v233
    %v237 = vld [vmem:[%s1 + $0x60] sm:$0xff]
    %v238 = vld [vmem:[%s1 + $0x68] sm:$0xff]
    %v239 = vld [vmem:[%s1 + $0x70] sm:$0xff]
    %v240 = vld [vmem:[%s1 + $0x78] sm:$0xf]
    %v241 = vld [vmem:[%s1 + $0x80] sm:$0xf]
    %vm242 = vcmask 228352
    %v243 = vsel %vm242, %v235, 0.0
    %vm244 = vcmask 226304
    %v245 = vsel %vm244, %v236, 0.0
    %v246 = vadd.f32 %v243, %v245
    %v247 = vrot.slane %v246, 4
    %v248 = vadd.f32 %v246, %v247
    %v249 = vrot.slane %v248, 2
    %v250 = vadd.f32 %v248, %v249
    %v251 = vrot.slane %v250, 1
    %v252 = vadd.f32 %v250, %v251
    %v254 = vsel %vm242, %v252, 0
    %vm256 = vcmask 1043456
    %v258 = vsel %vm256, %v240, 0
    %260 = vmatpush.msra.mxu0 0.0
    %261 = vmatpush.msra.mxu0 0.0
    %262 = vmatpush.msra.mxu0 0.0
    %263 = vmatpush.msra.mxu0 0.0
    %264 = vmatpush.msra.mxu0 0.0
    %265 = vmatpush.msra.mxu0 0.0
    %266 = vmatpush.msra.mxu0 0.0
    %267 = vmatpush.msra.mxu0 0.0
    %268 = vmatpush.msra.mxu0 0.0
    %269 = vmatpush.msra.mxu0 0.0
    %270 = vmatpush.msra.mxu0 0.0
    %271 = vmatpush.msra.mxu0 0.0
    %272 = vmatpush.msra.mxu0 %v258
    %273 = vmatpush.msra.mxu0 %v239
    %274 = vmatpush.msra.mxu0 %v238
    %275 = vmatpush.msra.mxu0 %v237
    %276 = vmatmul.f32.gmra.mxu0 %v254
    %v277 = vpop.f32.mrf.mxu0
    %v278 = vadd.f32 0.0, %v277
    %279 = vdwg.mxu0
    %v280 = vrcp.pop 98.0
    %v281 = vmul.f32 98.0, %v280
    %v282 = vsub.f32 1.0, %v281
    %v283 = vmul.f32 %v280, %v282
    %v284 = vadd.f32 %v280, %v283
    %vm285 = vweird.f32 %v280
    %v286 = vsel %vm285, %v280, %v284
    %v287 = vmul.f32 %v278, %v286
    %vm288 = vcmask 31744
    %v290 = vsel %vm288, %v287, 0
    %v293 = vsel %vm256, %v241, 0
    %295 = vmatpush.msra.mxu0 0.0
    %296 = vmatpush.msra.mxu0 0.0
    %297 = vmatpush.msra.mxu0 0.0
    %298 = vmatpush.msra.mxu0 0.0
    %299 = vmatpush.msra.mxu0 0.0
    %300 = vmatpush.msra.mxu0 0.0
    %301 = vmatpush.msra.mxu0 0.0
    %302 = vmatpush.msra.mxu0 0.0
    %303 = vmatpush.msra.mxu0 0.0
    %304 = vmatpush.msra.mxu0 0.0
    %305 = vmatpush.msra.mxu0 0.0
    %306 = vmatpush.msra.mxu0 0.0
    %307 = vmatpush.msra.mxu0 0.0
    %308 = vmatpush.msra.mxu0 0.0
    %309 = vmatpush.msra.mxu0 0.0
    %310 = vmatpush.msra.mxu0 %v293
    %311 = vmatmul.f32.gmra.mxu0 %v290
    %v312 = vpop.f32.mrf.mxu0
    %v313 = vadd.f32 0.0, %v312
    %314 = vdwg.mxu0
    %v315 = vperm.slane %v313, 0
    %v316 = vsub.f32 %v235, %v315
    %v317 = vsub.f32 %v236, %v315
    %v318 = vmul.f32 %v316, %v316
    %v319 = vmul.f32 %v317, %v317
    %v320 = vsel %vm242, %v318, 0.0
    %v321 = vsel %vm244, %v319, 0.0
    %v322 = vadd.f32 %v320, %v321
    %v323 = vrot.slane %v322, 4
    %v324 = vadd.f32 %v322, %v323
    %v325 = vrot.slane %v324, 2
    %v326 = vadd.f32 %v324, %v325
    %v327 = vrot.slane %v326, 1
    %v328 = vadd.f32 %v326, %v327
    %v330 = vsel %vm242, %v328, 0
    %332 = vmatpush.msra.mxu0 0.0
    %333 = vmatpush.msra.mxu0 0.0
    %334 = vmatpush.msra.mxu0 0.0
    %335 = vmatpush.msra.mxu0 0.0
    %336 = vmatpush.msra.mxu0 0.0
    %337 = vmatpush.msra.mxu0 0.0
    %338 = vmatpush.msra.mxu0 0.0
    %339 = vmatpush.msra.mxu0 0.0
    %340 = vmatpush.msra.mxu0 0.0
    %341 = vmatpush.msra.mxu0 0.0
    %342 = vmatpush.msra.mxu0 0.0
    %343 = vmatpush.msra.mxu0 0.0
    %344 = vmatpush.msra.mxu0 %v258
    %345 = vmatpush.msra.mxu0 %v239
    %346 = vmatpush.msra.mxu0 %v238
    %347 = vmatpush.msra.mxu0 %v237
    %348 = vmatmul.f32.gmra.mxu0 %v330
    %v349 = vpop.f32.mrf.mxu0
    %v350 = vadd.f32 0.0, %v349
    %351 = vdwg.mxu0
    %v352 = vmul.f32 %v350, %v286
    %v353 = vld [vmem:[%s1 + $0x88] sm:$0x1]
    %v354 = vadd.f32 %v352, 1e-05
    %v355 = vrsqrt.pop %v354
    %v356 = vmul.f32 %v355, %v354
    %v357 = vmul.f32 %v356, %v355
    %v358 = vmul.f32 0.5, %v357
    %v359 = vsub.f32 1.5, %v358
    %v360 = vmul.f32 %v355, %v359
    %vm361 = vweird.f32 %v354
    %vm362 = vweird.f32 %v355
    %vm363 = vmor %vm361, %vm362
    %v364 = vsel %vm363, %v355, %v360
    %v365 = vmul.f32 %v353, %v364
    %v367 = vsel %vm288, %v365, 0
    %369 = vmatpush.msra.mxu0 0.0
    %370 = vmatpush.msra.mxu0 0.0
    %371 = vmatpush.msra.mxu0 0.0
    %372 = vmatpush.msra.mxu0 0.0
    %373 = vmatpush.msra.mxu0 0.0
    %374 = vmatpush.msra.mxu0 0.0
    %375 = vmatpush.msra.mxu0 0.0
    %376 = vmatpush.msra.mxu0 0.0
    %377 = vmatpush.msra.mxu0 0.0
    %378 = vmatpush.msra.mxu0 0.0
    %379 = vmatpush.msra.mxu0 0.0
    %380 = vmatpush.msra.mxu0 0.0
    %381 = vmatpush.msra.mxu0 0.0
    %382 = vmatpush.msra.mxu0 0.0
    %383 = vmatpush.msra.mxu0 0.0
    %384 = vmatpush.msra.mxu0 %v293
    %385 = vmatmul.f32.gmra.mxu0 %v367
    %v386 = vpop.f32.mrf.mxu0
    %v387 = vadd.f32 0.0, %v386
    %388 = vdwg.mxu0
    %v389 = vld [vmem:[%s1 + $0x90] sm:$0x1]
    %v391 = vsel %vm288, %v389, 0
    %393 = vmatpush.msra.mxu0 0.0
    %394 = vmatpush.msra.mxu0 0.0
    %395 = vmatpush.msra.mxu0 0.0
    %396 = vmatpush.msra.mxu0 0.0
    %397 = vmatpush.msra.mxu0 0.0
    %398 = vmatpush.msra.mxu0 0.0
    %399 = vmatpush.msra.mxu0 0.0
    %400 = vmatpush.msra.mxu0 0.0
    %401 = vmatpush.msra.mxu0 0.0
    %402 = vmatpush.msra.mxu0 0.0
    %403 = vmatpush.msra.mxu0 0.0
    %404 = vmatpush.msra.mxu0 0.0
    %405 = vmatpush.msra.mxu0 0.0
    %406 = vmatpush.msra.mxu0 0.0
    %407 = vmatpush.msra.mxu0 0.0
    %408 = vmatpush.msra.mxu0 %v293
    %409 = vmatmul.f32.gmra.mxu0 %v391
    %v410 = vpop.f32.mrf.mxu0
    %v411 = vadd.f32 0.0, %v410
    %412 = vdwg.mxu0
    %v413 = vperm.slane %v387, 0
    %v414 = vmul.f32 %v316, %v413
    %v415 = vmul.f32 %v317, %v413
    %v416 = vperm.slane %v411, 0
    %v417 = vadd.f32 %v414, %v416
    %v418 = vadd.f32 %v415, %v416
    %v419 = vmax.f32 %v417, 0.0
    %v420 = vmax.f32 %v418, 0.0
    %v421 = vld [vmem:[%s1 + $0x98] sm:$0xff]
    %v422 = vld [vmem:[%s1 + $0xa0] sm:$0xff]
    %v423 = vld [vmem:[%s1 + $0xa8] sm:$0xff]
    %v424 = vld [vmem:[%s1 + $0xb0] sm:$0xf]
    %v426 = vsel %vm242, %v419, 0
    %v429 = vsel %vm242, %v420, 0
    %v432 = vsel %vm256, %v424, 0
    %434 = vmatpush.msra.mxu0 0.0
    %435 = vmatpush.msra.mxu0 0.0
    %436 = vmatpush.msra.mxu0 0.0
    %437 = vmatpush.msra.mxu0 0.0
    %438 = vmatpush.msra.mxu0 0.0
    %439 = vmatpush.msra.mxu0 0.0
    %440 = vmatpush.msra.mxu0 0.0
    %441 = vmatpush.msra.mxu0 0.0
    %442 = vmatpush.msra.mxu0 0.0
    %443 = vmatpush.msra.mxu0 0.0
    %444 = vmatpush.msra.mxu0 0.0
    %445 = vmatpush.msra.mxu0 0.0
    %446 = vmatpush.msra.mxu0 %v432
    %447 = vmatpush.msra.mxu0 %v423
    %448 = vmatpush.msra.mxu0 %v422
    %449 = vmatpush.msra.mxu0 %v421
    %450 = vmatmul.f32.gmra.mxu0 %v426
    %v451 = vpop.f32.mrf.mxu0
    %v452 = vadd.f32 0.0, %v451
    %453 = vmatmul.f32.gmra.mxu0 %v429
    %v454 = vpop.f32.mrf.mxu0
    %v455 = vadd.f32 0.0, %v454
    %456 = vdwg.mxu0
    %v457 = vld [vmem:[%s1 + $0xb8] sm:$0x3f]
    %v458 = vld [vmem:[%s1 + $0xc0] sm:$0x3f]
    %461 = vrot.lane.b32.xlu0 %v452, 104
    %v462 = vpop.permute.xlu0 %461
    %463 = vrot.lane.b32.xlu0 %v455, 104
    %v464 = vpop.permute.xlu0 %463
    %vm466 = vcmask 113664
    %v468 = vsel %vm466, %v458, 0
    %vm470 = vcmask 1045504
    %v471 = vsel %vm470, %v464, 0
    %473 = vmatpush.msra.mxu0 0.0
    %474 = vmatpush.msra.mxu0 0.0
    %475 = vmatpush.msra.mxu0 0.0
    %476 = vmatpush.msra.mxu0 0.0
    %477 = vmatpush.msra.mxu0 0.0
    %478 = vmatpush.msra.mxu0 0.0
    %479 = vmatpush.msra.mxu0 0.0
    %480 = vmatpush.msra.mxu0 0.0
    %481 = vmatpush.msra.mxu0 0.0
    %482 = vmatpush.msra.mxu0 0.0
    %483 = vmatpush.msra.mxu0 0.0
    %484 = vmatpush.msra.mxu0 0.0
    %485 = vmatpush.msra.mxu0 0.0
    %486 = vmatpush.msra.mxu0 0.0
    %487 = vmatpush.msra.mxu0 %v471
    %488 = vmatpush.msra.mxu0 %v462
    %489 = vmatmul.f32.gmra.mxu0 %v468
    %v490 = vpop.f32.mrf.mxu0
    %v491 = vadd.f32 0.0, %v490
    %492 = vdwg.mxu0
    %v494 = vsel %vm466, %v457, 0
    %v496 = vsel %vm470, %v455, 0
    %498 = vmatpush.msra.mxu0 0.0
    %499 = vmatpush.msra.mxu0 0.0
    %500 = vmatpush.msra.mxu0 0.0
    %501 = vmatpush.msra.mxu0 0.0
    %502 = vmatpush.msra.mxu0 0.0
    %503 = vmatpush.msra.mxu0 0.0
    %504 = vmatpush.msra.mxu0 0.0
    %505 = vmatpush.msra.mxu0 0.0
    %506 = vmatpush.msra.mxu0 0.0
    %507 = vmatpush.msra.mxu0 0.0
    %508 = vmatpush.msra.mxu0 0.0
    %509 = vmatpush.msra.mxu0 0.0
    %510 = vmatpush.msra.mxu0 0.0
    %511 = vmatpush.msra.mxu0 0.0
    %512 = vmatpush.msra.mxu0 %v496
    %513 = vmatpush.msra.mxu0 %v452
    %514 = vmatmul.f32.gmra.mxu0 %v494
    %v515 = vpop.f32.mrf.mxu0
    %v516 = vadd.f32 %v491, %v515
    %517 = vdwg.mxu0
    %v518 = vld [vmem:[%s1 + $0xc8] sm:$0x3f]
    %519 = vrot.lane.b32.xlu0 %v452, 80
    %v520 = vpop.permute.xlu0 %519
    %521 = vrot.lane.b32.xlu0 %v455, 80
    %v522 = vpop.permute.xlu0 %521
    %v525 = vsel %vm466, %v518, 0
    %v527 = vsel %vm470, %v522, 0
    %529 = vmatpush.msra.mxu0 0.0
    %530 = vmatpush.msra.mxu0 0.0
    %531 = vmatpush.msra.mxu0 0.0
    %532 = vmatpush.msra.mxu0 0.0
    %533 = vmatpush.msra.mxu0 0.0
    %534 = vmatpush.msra.mxu0 0.0
    %535 = vmatpush.msra.mxu0 0.0
    %536 = vmatpush.msra.mxu0 0.0
    %537 = vmatpush.msra.mxu0 0.0
    %538 = vmatpush.msra.mxu0 0.0
    %539 = vmatpush.msra.mxu0 0.0
    %540 = vmatpush.msra.mxu0 0.0
    %541 = vmatpush.msra.mxu0 0.0
    %542 = vmatpush.msra.mxu0 0.0
    %543 = vmatpush.msra.mxu0 %v527
    %544 = vmatpush.msra.mxu0 %v520
    %545 = vmatmul.f32.gmra.mxu0 %v525
    %v546 = vpop.f32.mrf.mxu0
    %v547 = vadd.f32 0.0, %v546
    %548 = vdwg.mxu0
    %v549 = vadd.f32 %v516, %v547
    %v550 = vld [vmem:[%s1 + $0xd0] sm:$0xff]
    %v551 = vld [vmem:[%s1 + $0xd8] sm:$0xff]
    %v552 = vld [vmem:[%s1 + $0xe0] sm:$0xff]
    %v553 = vld [vmem:[%s1 + $0xe8] sm:$0xff]
    %vm554 = vcmask 193536
    %v555 = vsel %vm554, %v549, 0.0
    %v556 = vrot.slane %v555, 4
    %v557 = vadd.f32 %v555, %v556
    %v558 = vrot.slane %v557, 2
    %v559 = vadd.f32 %v557, %v558
    %v560 = vrot.slane %v559, 1
    %v561 = vadd.f32 %v559, %v560
    %vm562 = vcmask 195584
    %v564 = vsel %vm562, %v561, 0
    %566 = vmatpush.msra.mxu0 0.0
    %567 = vmatpush.msra.mxu0 0.0
    %568 = vmatpush.msra.mxu0 0.0
    %569 = vmatpush.msra.mxu0 0.0
    %570 = vmatpush.msra.mxu0 0.0
    %571 = vmatpush.msra.mxu0 0.0
    %572 = vmatpush.msra.mxu0 0.0
    %573 = vmatpush.msra.mxu0 0.0
    %574 = vmatpush.msra.mxu0 0.0
    %575 = vmatpush.msra.mxu0 0.0
    %576 = vmatpush.msra.mxu0 0.0
    %577 = vmatpush.msra.mxu0 0.0
    %578 = vmatpush.msra.mxu0 0.0
    %579 = vmatpush.msra.mxu0 %v552
    %580 = vmatpush.msra.mxu0 %v551
    %581 = vmatpush.msra.mxu0 %v550
    %582 = vmatmul.f32.gmra.mxu0 %v564
    %v583 = vpop.f32.mrf.mxu0
    %v584 = vadd.f32 0.0, %v583
    %585 = vdwg.mxu0
    %v586 = vrcp.pop 18.0
    %v587 = vmul.f32 18.0, %v586
    %v588 = vsub.f32 1.0, %v587
    %v589 = vmul.f32 %v586, %v588
    %v590 = vadd.f32 %v586, %v589
    %vm591 = vweird.f32 %v586
    %v592 = vsel %vm591, %v586, %v590
    %v593 = vmul.f32 %v584, %v592
    %vm594 = vcmask 64512
    %v596 = vsel %vm594, %v593, 0
    %598 = vmatpush.msra.mxu0 0.0
    %599 = vmatpush.msra.mxu0 0.0
    %600 = vmatpush.msra.mxu0 0.0
    %601 = vmatpush.msra.mxu0 0.0
    %602 = vmatpush.msra.mxu0 0.0
    %603 = vmatpush.msra.mxu0 0.0
    %604 = vmatpush.msra.mxu0 0.0
    %605 = vmatpush.msra.mxu0 0.0
    %606 = vmatpush.msra.mxu0 0.0
    %607 = vmatpush.msra.mxu0 0.0
    %608 = vmatpush.msra.mxu0 0.0
    %609 = vmatpush.msra.mxu0 0.0
    %610 = vmatpush.msra.mxu0 0.0
    %611 = vmatpush.msra.mxu0 0.0
    %612 = vmatpush.msra.mxu0 0.0
    %613 = vmatpush.msra.mxu0 %v553
    %614 = vmatmul.f32.gmra.mxu0 %v596
    %v615 = vpop.f32.mrf.mxu0
    %v616 = vadd.f32 0.0, %v615
    %617 = vdwg.mxu0
    %v618 = vperm.slane %v616, 0
    %v619 = vsub.f32 %v549, %v618
    %v620 = vmul.f32 %v619, %v619
    %v621 = vsel %vm554, %v620, 0.0
    %v622 = vrot.slane %v621, 4
    %v623 = vadd.f32 %v621, %v622
    %v624 = vrot.slane %v623, 2
    %v625 = vadd.f32 %v623, %v624
    %v626 = vrot.slane %v625, 1
    %v627 = vadd.f32 %v625, %v626
    %v629 = vsel %vm562, %v627, 0
    %631 = vmatpush.msra.mxu0 0.0
    %632 = vmatpush.msra.mxu0 0.0
    %633 = vmatpush.msra.mxu0 0.0
    %634 = vmatpush.msra.mxu0 0.0
    %635 = vmatpush.msra.mxu0 0.0
    %636 = vmatpush.msra.mxu0 0.0
    %637 = vmatpush.msra.mxu0 0.0
    %638 = vmatpush.msra.mxu0 0.0
    %639 = vmatpush.msra.mxu0 0.0
    %640 = vmatpush.msra.mxu0 0.0
    %641 = vmatpush.msra.mxu0 0.0
    %642 = vmatpush.msra.mxu0 0.0
    %643 = vmatpush.msra.mxu0 0.0
    %644 = vmatpush.msra.mxu0 %v552
    %645 = vmatpush.msra.mxu0 %v551
    %646 = vmatpush.msra.mxu0 %v550
    %647 = vmatmul.f32.gmra.mxu0 %v629
    %v648 = vpop.f32.mrf.mxu0
    %v649 = vadd.f32 0.0, %v648
    %650 = vdwg.mxu0
    %v651 = vmul.f32 %v649, %v592
    %v652 = vld [vmem:[%s1 + $0xf0] sm:$0x1]
    %v653 = vadd.f32 %v651, 1e-05
    %v654 = vrsqrt.pop %v653
    %v655 = vmul.f32 %v654, %v653
    %v656 = vmul.f32 %v655, %v654
    %v657 = vmul.f32 0.5, %v656
    %v658 = vsub.f32 1.5, %v657
    %v659 = vmul.f32 %v654, %v658
    %vm660 = vweird.f32 %v653
    %vm661 = vweird.f32 %v654
    %vm662 = vmor %vm660, %vm661
    %v663 = vsel %vm662, %v654, %v659
    %v664 = vmul.f32 %v652, %v663
    %v666 = vsel %vm594, %v664, 0
    %668 = vmatpush.msra.mxu0 0.0
    %669 = vmatpush.msra.mxu0 0.0
    %670 = vmatpush.msra.mxu0 0.0
    %671 = vmatpush.msra.mxu0 0.0
    %672 = vmatpush.msra.mxu0 0.0
    %673 = vmatpush.msra.mxu0 0.0
    %674 = vmatpush.msra.mxu0 0.0
    %675 = vmatpush.msra.mxu0 0.0
    %676 = vmatpush.msra.mxu0 0.0
    %677 = vmatpush.msra.mxu0 0.0
    %678 = vmatpush.msra.mxu0 0.0
    %679 = vmatpush.msra.mxu0 0.0
    %680 = vmatpush.msra.mxu0 0.0
    %681 = vmatpush.msra.mxu0 0.0
    %682 = vmatpush.msra.mxu0 0.0
    %683 = vmatpush.msra.mxu0 %v553
    %684 = vmatmul.f32.gmra.mxu0 %v666
    %v685 = vpop.f32.mrf.mxu0
    %v686 = vadd.f32 0.0, %v685
    %687 = vdwg.mxu0
    %v688 = vld [vmem:[%s1 + $0xf8] sm:$0x1]
    %v690 = vsel %vm594, %v688, 0
    %692 = vmatpush.msra.mxu0 0.0
    %693 = vmatpush.msra.mxu0 0.0
    %694 = vmatpush.msra.mxu0 0.0
    %695 = vmatpush.msra.mxu0 0.0
    %696 = vmatpush.msra.mxu0 0.0
    %697 = vmatpush.msra.mxu0 0.0
    %698 = vmatpush.msra.mxu0 0.0
    %699 = vmatpush.msra.mxu0 0.0
    %700 = vmatpush.msra.mxu0 0.0
    %701 = vmatpush.msra.mxu0 0.0
    %702 = vmatpush.msra.mxu0 0.0
    %703 = vmatpush.msra.mxu0 0.0
    %704 = vmatpush.msra.mxu0 0.0
    %705 = vmatpush.msra.mxu0 0.0
    %706 = vmatpush.msra.mxu0 0.0
    %707 = vmatpush.msra.mxu0 %v553
    %708 = vmatmul.f32.gmra.mxu0 %v690
    %v709 = vpop.f32.mrf.mxu0
    %v710 = vadd.f32 0.0, %v709
    %711 = vdwg.mxu0
    %v712 = vperm.slane %v686, 0
    %v713 = vmul.f32 %v619, %v712
    %v714 = vperm.slane %v710, 0
    %v715 = vadd.f32 %v713, %v714
    %v716 = vmax.f32 %v715, 0.0
    %v718 = vrot.slane %v716, 2
    %vm720 = vcmask 1040384
    %v721 = vsel %vm720, %v716, %v718
    %v722 = vrot.slane %v716, 1
    %v724 = vrot.slane %v716, 3
    %v726 = vsel %vm720, %v722, %v724
    %v727 = vrot.slane %v716, 4
    %v729 = vsel %vm720, %v718, %v727
    %731 = vrot.lane.b32.xlu0 %v726, 24
    %v732 = vpop.permute.xlu0 %731
    %735 = vrot.lane.b32.xlu0 %v729, 48
    %v736 = vpop.permute.xlu0 %735
    %v738 = vsel %vm562, %v721, %v732
    %v739 = vsel %vm72, %v738, %v736
    %v740 = vld [vmem:[%s1 + $0x100] sm:$0xff]
    %v741 = vld [vmem:[%s1 + $0x108] sm:$0xff]
    %v742 = vld [vmem:[%s1 + $0x110] sm:$0xff]
    %v743 = vld [vmem:[%s1 + $0x118] sm:$0xff]
    %v744 = vld [vmem:[%s1 + $0x120] sm:$0xff]
    %v745 = vld [vmem:[%s1 + $0x128] sm:$0xff]
    %v746 = vld [vmem:[%s1 + $0x130] sm:$0xff]
    %v747 = vld [vmem:[%s1 + $0x138] sm:$0xff]
    %v748 = vld [vmem:[%s1 + $0x140] sm:$0xff]
    %v749 = vld [vmem:[%s1 + $0x148] sm:$0x1]
    %v750 = vperm.slane %v749, 0
    %vm751 = vcmask 588800
    %v753 = vsel %vm751, %v739, 0
    %755 = vmatpush.msra.mxu0 0.0
    %756 = vmatpush.msra.mxu0 0.0
    %757 = vmatpush.msra.mxu0 0.0
    %758 = vmatpush.msra.mxu0 0.0
    %759 = vmatpush.msra.mxu0 0.0
    %760 = vmatpush.msra.mxu0 0.0
    %761 = vmatpush.msra.mxu0 0.0
    %762 = vmatpush.msra.mxu0 %v748
    %763 = vmatpush.msra.mxu0 %v747
    %764 = vmatpush.msra.mxu0 %v746
    %765 = vmatpush.msra.mxu0 %v745
    %766 = vmatpush.msra.mxu0 %v744
    %767 = vmatpush.msra.mxu0 %v743
    %768 = vmatpush.msra.mxu0 %v742
    %769 = vmatpush.msra.mxu0 %v741
    %770 = vmatpush.msra.mxu0 %v740
    %771 = vmatmul.f32.gmra.mxu0 %v753
    %v772 = vpop.f32.mrf.mxu0
    %v773 = vadd.f32 %v750, %v772
    %774 = vdwg.mxu0
    %v775 = vmax.f32 %v773, 0.0
    %v776 = vld [vmem:[%s1 + $0x150] sm:$0xff]
    %v777 = vld [vmem:[%s1 + $0x158] sm:$0xff]
    %v778 = vld [vmem:[%s1 + $0x160] sm:$0xff]
    %v779 = vld [vmem:[%s1 + $0x168] sm:$0xff]
    %v780 = vld [vmem:[%s1 + $0x170] sm:$0x1]
    %v781 = vperm.slane %v780, 0
    %v783 = vsel %vm61, %v775, 0
    %785 = vmatpush.msra.mxu0 0.0
    %786 = vmatpush.msra.mxu0 0.0
    %787 = vmatpush.msra.mxu0 0.0
    %788 = vmatpush.msra.mxu0 0.0
    %789 = vmatpush.msra.mxu0 0.0
    %790 = vmatpush.msra.mxu0 0.0
    %791 = vmatpush.msra.mxu0 0.0
    %792 = vmatpush.msra.mxu0 0.0
    %793 = vmatpush.msra.mxu0 0.0
    %794 = vmatpush.msra.mxu0 0.0
    %795 = vmatpush.msra.mxu0 0.0
    %796 = vmatpush.msra.mxu0 0.0
    %797 = vmatpush.msra.mxu0 %v779
    %798 = vmatpush.msra.mxu0 %v778
    %799 = vmatpush.msra.mxu0 %v777
    %800 = vmatpush.msra.mxu0 %v776
    %801 = vmatmul.f32.gmra.mxu0 %v783
    %v802 = vpop.f32.mrf.mxu0
    %v803 = vadd.f32 %v781, %v802
    %804 = vdwg.mxu0
    %v805 = vmax.f32 %v803, 0.0
    %vm806 = vcmask 123904
    %807 = vst.msk [vmem:[#allocation2] sm:$0x3] %vm806, %v805
    // Predicated region
    $region10: #{cnn_encoder_apply.1} parent=1 // pred_check
      _
    $region11: #{cnn_encoder_apply.1} parent=1 // pred_check_branch
      %809 = sbr.rel (0) target = $region13
    $region12: #{cnn_encoder_apply.1} parent=1 // pred_region
      %811 = vsyncadd [#allocation3], 0
      %s813 = sshll.u32 [#allocation2], 4
      %s814 = int_to_ptr.vmem [resolvable:$true] %s813
      %s815 = sshll.u32 %s2, 4
      %s816 = int_to_ptr.hbm [resolvable:$true] %s815
      %818 = dma.vmem_to_hbm [thread:$0]  %s814, 32, %s816, [#allocation3]
    $region13: #{cnn_encoder_apply.1} parent=1 // pred_fallthru
      _
    // Predicated region
    $region14: #{cnn_encoder_apply.1} parent=1 // pred_check
      _
    $region15: #{cnn_encoder_apply.1} parent=1 // pred_check_branch
      %820 = sbr.rel (0) target = $region17
    $region16: #{cnn_encoder_apply.1} parent=1 // pred_region
      %822 = dma.done [#allocation3], 32
    $region17: #{cnn_encoder_apply.1} parent=1 // pred_fallthru
      _
    %823 = vsyncpa [#allocation3], 1

</llo_original>
